<compile_context>
chip_gen: v5e
topology: v5e:2x2
jax: 0.10.0
libtpu: 0.0.40
codegen_flags: <defaults>
</compile_context>

<pallas_src>
import functools
from typing import List

import numpy as np

import jax
import jax.numpy as jnp
from jax.experimental import pallas as pl
from jax.experimental.pallas import tpu as pltpu


def _round_up(x: int, m: int) -> int:
    return ((x + m - 1) // m) * m


# ----------------------------------------------------------------------------
# Static index plumbing (mirror of DynSynLayerBase.__init__), as dense one-hot
# operators.  All are tiny (a few KB) and stay VMEM-resident.
# ----------------------------------------------------------------------------
def build_dynsyn_constants(muscle_groups: List[List[int]]):
    muscle_dims = max(max(g) for g in muscle_groups) + 1
    muscle_group_num = len(muscle_groups)
    out_dim = muscle_dims - muscle_group_num  # == len(weight_muscle_indx)

    weight_muscle_indx = []
    for g in muscle_groups:
        if len(g) > 1:
            weight_muscle_indx.extend(g[1:])
    assert out_dim == len(weight_muscle_indx), (
        "muscle_groups must partition range(muscle_dims)")

    # G[g, m] = 1 iff muscle m belongs to group g.
    # x @ G == repeat_interleave(x, group_dims)[..., muscle_indx]  exactly.
    G = np.zeros((muscle_group_num, muscle_dims), np.float32)
    for gi, g in enumerate(muscle_groups):
        for m in g:
            G[gi, m] = 1.0

    # S[w, m] = 1 iff weight column w scatters onto muscle m.
    S = np.zeros((out_dim, muscle_dims), np.float32)
    for wi, m in enumerate(weight_muscle_indx):
        S[wi, m] = 1.0

    # nonweight_mask[0, m] = 1 iff muscle m has no learned weight (scale = 1).
    nonweight_mask = np.ones((1, muscle_dims), np.float32)
    if weight_muscle_indx:
        nonweight_mask[0, np.asarray(weight_muscle_indx)] = 0.0

    return dict(
        muscle_dims=muscle_dims,
        muscle_group_num=muscle_group_num,
        out_dim=out_dim,
        G=jnp.asarray(G),
        S=jnp.asarray(S),
        nonweight_mask=jnp.asarray(nonweight_mask),
    )


# ----------------------------------------------------------------------------
# Pallas kernel: one batch tile per grid step.
# ----------------------------------------------------------------------------
def dynsyn_kernel(lat_ref, x_ref, w_ref, b_ref, g_ref, s_ref, nw_ref, amp_ref,
                  o_ref):
    # MXU launch #1: mean of the squashed Gaussian (the nn.Linear `mu`).
    mean_w = jnp.dot(lat_ref[...], w_ref[...],
                     precision=jax.lax.Precision.HIGHEST,
                     preferred_element_type=jnp.float32) + b_ref[...]

    # Deterministic squashed-Gaussian action: tanh(mean); then
    # weight = clamp(weight * 0.1, -amp, amp) + 1.
    amp = amp_ref[0]
    weight = jnp.clip(jnp.tanh(mean_w) * 0.1, -amp, amp) + 1.0

    # MXU launch #2: repeat_interleave + permutation of x onto muscle slots
    # (G is the one-hot group-membership matrix -> exact).
    x_exp = jnp.dot(x_ref[...], g_ref[...],
                    precision=jax.lax.Precision.HIGHEST,
                    preferred_element_type=jnp.float32)

    # MXU launch #3: scatter the weight columns onto their muscle slots
    # (S one-hot -> exact); nw_ref supplies the implicit 1 for non-weighted
    # muscles.  (Tiny contraction; on v5e a static lane-gather of `weight`
    # columns would avoid the f32 MXU pass -- kernel is mem-bound either way.)
    scale = jnp.dot(weight, s_ref[...],
                    precision=jax.lax.Precision.HIGHEST,
                    preferred_element_type=jnp.float32) + nw_ref[...]

    o_ref[...] = (x_exp * scale).astype(o_ref.dtype)


# ----------------------------------------------------------------------------
# Wrapper: picks the batch tile, no input/output padding or copies.
# ----------------------------------------------------------------------------
@functools.partial(jax.jit, static_argnames=("block_b",))
def dynsyn_forward(x, latent_pi, W, b, G, S, nonweight_mask, amp, *,
                   block_b=1024):
    B, D = latent_pi.shape
    Gn = x.shape[1]
    muscle_dims = G.shape[1]
    out_dim = W.shape[1]

    # Batch tile: multiple of 8 sublanes (f32), capped at block_b and at
    # ~ceil(B/2) so v7x's two TensorCores both get a grid step when possible.
    sub = 8
    bt = min(block_b, max(sub, _round_up(pl.cdiv(B, 2), sub)))
    if bt >= B:
        bt = B  # single full block (block dim == full array dim is legal)
    n_tiles = pl.cdiv(B, bt)

    return pl.pallas_call(
        dynsyn_kernel,
        out_shape=jax.ShapeDtypeStruct((B, muscle_dims), jnp.float32),
        grid=(n_tiles,),
        in_specs=[
            pl.BlockSpec((bt, D), lambda i: (i, 0)),                 # latent_pi (streamed)
            pl.BlockSpec((bt, Gn), lambda i: (i, 0)),                # x (streamed)
            pl.BlockSpec((D, out_dim), lambda i: (0, 0)),            # W (resident)
            pl.BlockSpec((1, out_dim), lambda i: (0, 0)),            # bias (resident)
            pl.BlockSpec((Gn, muscle_dims), lambda i: (0, 0)),       # G (resident)
            pl.BlockSpec((out_dim, muscle_dims), lambda i: (0, 0)),  # S (resident)
            pl.BlockSpec((1, muscle_dims), lambda i: (0, 0)),        # non-weight mask
            pl.BlockSpec(memory_space=pltpu.MemorySpace.SMEM),       # amp scalar
        ],
        out_specs=pl.BlockSpec((bt, muscle_dims), lambda i: (i, 0)),
        compiler_params=pltpu.CompilerParams(
            dimension_semantics=("parallel",)),
    )(latent_pi, x, W, b, G, S, nonweight_mask, amp)


# ----------------------------------------------------------------------------
# Pure-JAX reference mirroring the torch code literally (f32, for verification)
# ----------------------------------------------------------------------------
def dynsyn_reference(x, latent_pi, W, b, amp, muscle_groups):
    muscle_dims = max(max(g) for g in muscle_groups) + 1
    group_dims = np.asarray([len(g) for g in muscle_groups])
    weight_muscle_indx = []
    for g in muscle_groups:
        if len(g) > 1:
            weight_muscle_indx.extend(g[1:])

    mean_w = jnp.dot(latent_pi, W, precision=jax.lax.Precision.HIGHEST) + b
    weight = jnp.tanh(mean_w)                               # deterministic path
    weight = jnp.clip(weight * 0.1, -amp, amp) + 1.0

    x_rep = jnp.repeat(x, group_dims, axis=-1)
    muscle_indx = list(range(muscle_dims))
    total = 0
    for g in muscle_groups:
        for i in g:
            muscle_indx[i] = total
            total += 1
    x_perm = x_rep[..., jnp.asarray(muscle_indx)]
    x_perm = x_perm.at[..., jnp.asarray(weight_muscle_indx)].multiply(weight)
    return x_perm


# ----------------------------------------------------------------------------
if __name__ == "__main__":
    # Small synthetic config: 8 muscles in 3 groups, latent dim 32.
    muscle_groups = [[0, 1, 2], [3, 4], [5, 6, 7]]
    last_layer_dim = 32

    consts = build_dynsyn_constants(muscle_groups)

    key = jax.random.PRNGKey(0)
    k_w, k_b, k_data = jax.random.split(key, 3)
    W = jax.random.normal(k_w, (last_layer_dim, consts["out_dim"]),
                          jnp.float32) * 0.1
    b = jax.random.normal(k_b, (1, consts["out_dim"]), jnp.float32) * 0.01

    # Two batch sizes: one single full block, one that exercises a partial
    # (masked) last tile with grid=cdiv(B, bt).
    for batch in (4, 20):
        k_data, k_x, k_lat = jax.random.split(k_data, 3)
        x = jax.random.normal(k_x, (batch, consts["muscle_group_num"]),
                              jnp.float32)
        latent_pi = jax.random.normal(k_lat, (batch, last_layer_dim),
                                      jnp.float32)

        # amp=0.5 ~ after update_dynsyn_weight_amp(0.5); amp=0.0 == torch's
        # dynsyn_weight_amp=None path (forward sets it to 0 -> weight == 1).
        for amp_val in (0.5, 0.0):
            amp = jnp.asarray([amp_val], jnp.float32)
            y = dynsyn_forward(x, latent_pi, W, b,
                               consts["G"], consts["S"],
                               consts["nonweight_mask"], amp)
            y = jax.block_until_ready(y)

            y_ref = dynsyn_reference(x, latent_pi, W, b, amp_val, muscle_groups)
            assert y.shape == (batch, consts["muscle_dims"])
            # f32 end-to-end; tolerance only covers MXU pass decomposition and
            # transcendental-implementation differences.
            assert jnp.allclose(y, y_ref, atol=1e-4, rtol=1e-4), (
                batch, amp_val, np.max(np.abs(np.asarray(y - y_ref))))

    print("KERNEL_OK")
</pallas_src>

<mosaic_0001>
module attributes {stable_mosaic.version = 11 : i64} {
  func.func @dynsyn_kernel(%arg0: i32, %arg1: memref<4x32xf32, #tpu.memory_space<vmem>>, %arg2: memref<4x3xf32, #tpu.memory_space<vmem>>, %arg3: memref<32x5xf32, #tpu.memory_space<vmem>>, %arg4: memref<1x5xf32, #tpu.memory_space<vmem>>, %arg5: memref<3x8xf32, #tpu.memory_space<vmem>>, %arg6: memref<5x8xf32, #tpu.memory_space<vmem>>, %arg7: memref<1x8xf32, #tpu.memory_space<vmem>>, %arg8: memref<1xf32, #tpu.memory_space<smem>>, %arg9: memref<4x8xf32, #tpu.memory_space<vmem>>) attributes {dimension_semantics = [#tpu.dimension_semantics<parallel>], iteration_bounds = array<i64: 1>, scalar_prefetch = 0 : i64, scratch_operands = 0 : i64, tpu.core_type = #tpu.core_type<tc>, window_params = [{transform_indices = @transform_0, window_bounds = array<i64: 4, 32>}, {transform_indices = @transform_1, window_bounds = array<i64: 4, 3>}, {pipeline_mode = #tpu.pipeline_mode<synchronous>, transform_indices = @transform_2, window_bounds = array<i64: 32, 5>}, {pipeline_mode = #tpu.pipeline_mode<synchronous>, transform_indices = @transform_3, window_bounds = array<i64: 1, 5>}, {pipeline_mode = #tpu.pipeline_mode<synchronous>, transform_indices = @transform_4, window_bounds = array<i64: 3, 8>}, {pipeline_mode = #tpu.pipeline_mode<synchronous>, transform_indices = @transform_5, window_bounds = array<i64: 5, 8>}, {pipeline_mode = #tpu.pipeline_mode<synchronous>, transform_indices = @transform_6, window_bounds = array<i64: 1, 8>}, {transform_indices = @transform_7, window_bounds = array<i64: 1>}, {transform_indices = @transform_8, window_bounds = array<i64: 4, 8>}]} {
    %c0 = arith.constant 0 : index
    %c0_0 = arith.constant 0 : index
    %0 = vector.load %arg1[%c0, %c0_0] : memref<4x32xf32, #tpu.memory_space<vmem>>, vector<4x32xf32>
    %c0_1 = arith.constant 0 : index
    %c0_2 = arith.constant 0 : index
    %1 = vector.load %arg3[%c0_1, %c0_2] : memref<32x5xf32, #tpu.memory_space<vmem>>, vector<32x5xf32>
    %cst = arith.constant dense<0.000000e+00> : vector<4x5xf32>
    %2 = tpu.matmul %0, %1, %cst {dimension_numbers = #tpu.dot_dimension_numbers<[1], [0], [0], [1], [0, 0, 1, 1], [], []>, precision = #tpu.contract_precision<fp32>} : vector<4x32xf32>, vector<32x5xf32>, vector<4x5xf32> -> vector<4x5xf32>
    %c0_3 = arith.constant 0 : index
    %c0_4 = arith.constant 0 : index
    %3 = vector.load %arg4[%c0_3, %c0_4] : memref<1x5xf32, #tpu.memory_space<vmem>>, vector<1x5xf32>
    %4 = vector.broadcast %3 : vector<1x5xf32> to vector<4x5xf32>
    %5 = arith.addf %2, %4 : vector<4x5xf32>
    %c0_5 = arith.constant 0 : index
    %6 = memref.load %arg8[%c0_5] : memref<1xf32, #tpu.memory_space<smem>>
    %7 = math.tanh %5 : vector<4x5xf32>
    %cst_6 = arith.constant 1.000000e-01 : f32
    %8 = vector.broadcast %cst_6 : f32 to vector<4x5xf32>
    %9 = arith.mulf %7, %8 : vector<4x5xf32>
    %cst_7 = arith.constant 0.000000e+00 : f32
    %10 = arith.subf %cst_7, %6 : f32
    %11 = vector.broadcast %10 : f32 to vector<4x5xf32>
    %12 = arith.maximumf %11, %9 : vector<4x5xf32>
    %13 = vector.broadcast %6 : f32 to vector<4x5xf32>
    %14 = arith.minimumf %13, %12 : vector<4x5xf32>
    %cst_8 = arith.constant 1.000000e+00 : f32
    %15 = vector.broadcast %cst_8 : f32 to vector<4x5xf32>
    %16 = arith.addf %14, %15 : vector<4x5xf32>
    %c0_9 = arith.constant 0 : index
    %c0_10 = arith.constant 0 : index
    %17 = vector.load %arg2[%c0_9, %c0_10] : memref<4x3xf32, #tpu.memory_space<vmem>>, vector<4x3xf32>
    %c0_11 = arith.constant 0 : index
    %c0_12 = arith.constant 0 : index
    %18 = vector.load %arg5[%c0_11, %c0_12] : memref<3x8xf32, #tpu.memory_space<vmem>>, vector<3x8xf32>
    %cst_13 = arith.constant dense<0.000000e+00> : vector<4x8xf32>
    %19 = tpu.matmul %17, %18, %cst_13 {dimension_numbers = #tpu.dot_dimension_numbers<[1], [0], [0], [1], [0, 0, 1, 1], [], []>, precision = #tpu.contract_precision<fp32>} : vector<4x3xf32>, vector<3x8xf32>, vector<4x8xf32> -> vector<4x8xf32>
    %c0_14 = arith.constant 0 : index
    %c0_15 = arith.constant 0 : index
    %20 = vector.load %arg6[%c0_14, %c0_15] : memref<5x8xf32, #tpu.memory_space<vmem>>, vector<5x8xf32>
    %cst_16 = arith.constant dense<0.000000e+00> : vector<4x8xf32>
    %21 = tpu.matmul %16, %20, %cst_16 {dimension_numbers = #tpu.dot_dimension_numbers<[1], [0], [0], [1], [0, 0, 1, 1], [], []>, precision = #tpu.contract_precision<fp32>} : vector<4x5xf32>, vector<5x8xf32>, vector<4x8xf32> -> vector<4x8xf32>
    %c0_17 = arith.constant 0 : index
    %c0_18 = arith.constant 0 : index
    %22 = vector.load %arg7[%c0_17, %c0_18] : memref<1x8xf32, #tpu.memory_space<vmem>>, vector<1x8xf32>
    %23 = vector.broadcast %22 : vector<1x8xf32> to vector<4x8xf32>
    %24 = arith.addf %21, %23 : vector<4x8xf32>
    %25 = arith.mulf %19, %24 : vector<4x8xf32>
    %c0_19 = arith.constant 0 : index
    %c0_20 = arith.constant 0 : index
    %26 = vector.load %arg9[%c0_19, %c0_20] : memref<4x8xf32, #tpu.memory_space<vmem>>, vector<4x8xf32>
    tpu.vector_store %arg9[%c0_19, %c0_20], %25 {strides = array<i32>} : memref<4x8xf32, #tpu.memory_space<vmem>>, vector<4x8xf32>,
    return
  }
  func.func @transform_0(%arg0: i32) -> (i32, i32) {
    %c0_i32 = arith.constant 0 : i32
    %c0_i32_0 = arith.constant 0 : i32
    return %arg0, %c0_i32 : i32, i32
  }
  func.func @transform_1(%arg0: i32) -> (i32, i32) {
    %c0_i32 = arith.constant 0 : i32
    %c0_i32_0 = arith.constant 0 : i32
    return %arg0, %c0_i32 : i32, i32
  }
  func.func @transform_2(%arg0: i32) -> (i32, i32) {
    %c0_i32 = arith.constant 0 : i32
    %c0_i32_0 = arith.constant 0 : i32
    %c0_i32_1 = arith.constant 0 : i32
    return %c0_i32, %c0_i32_0 : i32, i32
  }
  func.func @transform_3(%arg0: i32) -> (i32, i32) {
    %c0_i32 = arith.constant 0 : i32
    %c0_i32_0 = arith.constant 0 : i32
    %c0_i32_1 = arith.constant 0 : i32
    return %c0_i32, %c0_i32_0 : i32, i32
  }
  func.func @transform_4(%arg0: i32) -> (i32, i32) {
    %c0_i32 = arith.constant 0 : i32
    %c0_i32_0 = arith.constant 0 : i32
    %c0_i32_1 = arith.constant 0 : i32
    return %c0_i32, %c0_i32_0 : i32, i32
  }
  func.func @transform_5(%arg0: i32) -> (i32, i32) {
    %c0_i32 = arith.constant 0 : i32
    %c0_i32_0 = arith.constant 0 : i32
    %c0_i32_1 = arith.constant 0 : i32
    return %c0_i32, %c0_i32_0 : i32, i32
  }
  func.func @transform_6(%arg0: i32) -> (i32, i32) {
    %c0_i32 = arith.constant 0 : i32
    %c0_i32_0 = arith.constant 0 : i32
    %c0_i32_1 = arith.constant 0 : i32
    return %c0_i32, %c0_i32_0 : i32, i32
  }
  func.func @transform_7(%arg0: i32) -> i32 {
    %c0_i32 = arith.constant 0 : i32
    %c0_i32_0 = arith.constant 0 : i32
    return %c0_i32 : i32
  }
  func.func @transform_8(%arg0: i32) -> (i32, i32) {
    %c0_i32 = arith.constant 0 : i32
    %c0_i32_0 = arith.constant 0 : i32
    return %arg0, %c0_i32 : i32, i32
  }
}

</mosaic_0001>

<llo_original>
// kernel: dynsyn_forward.1
$region0: #{dynsyn_forward.1}
  #allocation0 [shape = 'u32[]', space=smem, size = 0x4, offset = 0x4, fixed_abs, tag = 'smem constant byte address 0x4 - core index']
  #allocation1 [shape = 'u32[72,128]{1,0:T(1,128)}', space=vmem, size = 0x9000, scoped, tag = 'internal scratch']
  #allocation2 [shape = 'f32[1]{0:T(128)S(6)}', space=smem, size = 0x200, scoped, tag = 'scoped memory for dynsyn_forward.1']
  %s0 = inlined_call_operand.vmem [shape: f32[4,32], index: 0, kind: input, shape index: {}]
  %s1 = inlined_call_operand.vmem [shape: f32[4,3], index: 1, kind: input, shape index: {}]
  %s2 = inlined_call_operand.vmem [shape: f32[32,5], index: 2, kind: input, shape index: {}]
  %s3 = inlined_call_operand.vmem [shape: f32[1,5], index: 3, kind: input, shape index: {}]
  %s4 = inlined_call_operand.vmem [shape: f32[3,8], index: 4, kind: input, shape index: {}]
  %s5 = inlined_call_operand.vmem [shape: f32[5,8], index: 5, kind: input, shape index: {}]
  %s6 = inlined_call_operand.vmem [shape: f32[1,8], index: 6, kind: input, shape index: {}]
  %s7 = inlined_call_operand.<no memory space> [shape: f32[1], index: 7, kind: input, shape index: {}]
  %s8 = inlined_call_operand.hbm [shape: f32[4,8], index: 8, kind: output, shape index: {}]
  %s9 = sld [smem:[#allocation0]]
  $region42: #{dynsyn_forward.1} parent=0
    _
  %s11 = ssub.s32 1, %s9
  %s12 = scalar_select 0, %s11, %s9
  %13 = sst [smem:[#allocation2]] %s7
  $region1: #{dynsyn_forward.1} parent=0
    #allocation3 [shape = 'u8[2048]{0}', space=vmem, size = 0x800, scoped, tag = 'output window, operand 0, single buffered']
    #allocation4 [shape = 's32[1]{0}', space=sflag, size = 0x4, scoped, tag = 'scoped memory for dynsyn_forward.1']
    %14 = vsyncpa [#allocation4], 0
    // Predicated region
    $region2: #{dynsyn_forward.1} parent=1 // pred_check
      _
    $region3: #{dynsyn_forward.1} parent=1 // pred_check_branch
      %16 = sbr.rel (0) target = $region5
    $region4: #{dynsyn_forward.1} parent=1 // pred_region
      _
    $region5: #{dynsyn_forward.1} parent=1 // pred_fallthru
      _
    // Predicated region
    $region6: #{dynsyn_forward.1} parent=1 // pred_check
      _
    $region7: #{dynsyn_forward.1} parent=1 // pred_check_branch
      %18 = sbr.rel (0) target = $region9
    $region8: #{dynsyn_forward.1} parent=1 // pred_region
      _
    $region9: #{dynsyn_forward.1} parent=1 // pred_fallthru
      _
    // Predicated region
    $region10: #{dynsyn_forward.1} parent=1 // pred_check
      _
    $region11: #{dynsyn_forward.1} parent=1 // pred_check_branch
      %20 = sbr.rel (0) target = $region13
    $region12: #{dynsyn_forward.1} parent=1 // pred_region
      _
    $region13: #{dynsyn_forward.1} parent=1 // pred_fallthru
      _
    // Predicated region
    $region14: #{dynsyn_forward.1} parent=1 // pred_check
      _
    $region15: #{dynsyn_forward.1} parent=1 // pred_check_branch
      %22 = sbr.rel (0) target = $region17
    $region16: #{dynsyn_forward.1} parent=1 // pred_region
      _
    $region17: #{dynsyn_forward.1} parent=1 // pred_fallthru
      _
    // Predicated region
    $region18: #{dynsyn_forward.1} parent=1 // pred_check
      _
    $region19: #{dynsyn_forward.1} parent=1 // pred_check_branch
      %24 = sbr.rel (0) target = $region21
    $region20: #{dynsyn_forward.1} parent=1 // pred_region
      _
    $region21: #{dynsyn_forward.1} parent=1 // pred_fallthru
      _
    // Predicated region
    $region22: #{dynsyn_forward.1} parent=1 // pred_check
      _
    $region23: #{dynsyn_forward.1} parent=1 // pred_check_branch
      %26 = sbr.rel (0) target = $region25
    $region24: #{dynsyn_forward.1} parent=1 // pred_region
      _
    $region25: #{dynsyn_forward.1} parent=1 // pred_fallthru
      _
    // Predicated region
    $region26: #{dynsyn_forward.1} parent=1 // pred_check
      _
    $region27: #{dynsyn_forward.1} parent=1 // pred_check_branch
      %28 = sbr.rel (0) target = $region29
    $region28: #{dynsyn_forward.1} parent=1 // pred_region
      _
    $region29: #{dynsyn_forward.1} parent=1 // pred_fallthru
      _
    // Predicated region
    $region30: #{dynsyn_forward.1} parent=1 // pred_check
      _
    $region31: #{dynsyn_forward.1} parent=1 // pred_check_branch
      %30 = sbr.rel (0) target = $region33
    $region32: #{dynsyn_forward.1} parent=1 // pred_region
      _
    $region33: #{dynsyn_forward.1} parent=1 // pred_fallthru
      _
    %v31 = vld [vmem:[%s0] sm:$0xf]
    %v32 = vld [vmem:[%s2] sm:$0xff]
    %v33 = vld [vmem:[%s2 + $0x8] sm:$0xff]
    %v34 = vld [vmem:[%s2 + $0x10] sm:$0xff]
    %v35 = vld [vmem:[%s2 + $0x18] sm:$0xff]
    %v36 = vld [vmem:[%s3] sm:$0x1]
    %v38 = vperm.slane %v36, 0
    %vm40 = vcmask 261120
    %v42 = vsel %vm40, %v31, 0
    %44 = vmatpush.msra.mxu0 0.0
    %45 = vmatpush.msra.mxu0 0.0
    %46 = vmatpush.msra.mxu0 0.0
    %47 = vmatpush.msra.mxu0 0.0
    %48 = vmatpush.msra.mxu0 0.0
    %49 = vmatpush.msra.mxu0 0.0
    %50 = vmatpush.msra.mxu0 0.0
    %51 = vmatpush.msra.mxu0 0.0
    %52 = vmatpush.msra.mxu0 0.0
    %53 = vmatpush.msra.mxu0 0.0
    %54 = vmatpush.msra.mxu0 0.0
    %55 = vmatpush.msra.mxu0 0.0
    %v56 = vand.u32 %v35, 4294901760
    %57 = vmatpush.msra.mxu0 %v56
    %v58 = vand.u32 %v34, 4294901760
    %59 = vmatpush.msra.mxu0 %v58
    %v60 = vand.u32 %v33, 4294901760
    %61 = vmatpush.msra.mxu0 %v60
    %v62 = vand.u32 %v32, 4294901760
    %63 = vmatpush.msra.mxu0 %v62
    %v64 = vand.u32 %v42, 4294901760
    %v65 = vsub.f32 %v42, %v64
    %v66 = vand.u32 %v65, 4294901760
    %v67 = vsub.f32 %v65, %v66
    %v68 = vand.u32 %v67, 4294901760
    %69 = vmatmul.f32.gmra.mxu0 %v68
    %v70 = vpop.f32.mrf.mxu0
    %v71 = vadd.f32 %v38, %v70
    %72 = vdwg.mxu0
    %73 = vmatpush.msra.mxu0 0.0
    %74 = vmatpush.msra.mxu0 0.0
    %75 = vmatpush.msra.mxu0 0.0
    %76 = vmatpush.msra.mxu0 0.0
    %77 = vmatpush.msra.mxu0 0.0
    %78 = vmatpush.msra.mxu0 0.0
    %79 = vmatpush.msra.mxu0 0.0
    %80 = vmatpush.msra.mxu0 0.0
    %81 = vmatpush.msra.mxu0 0.0
    %82 = vmatpush.msra.mxu0 0.0
    %83 = vmatpush.msra.mxu0 0.0
    %84 = vmatpush.msra.mxu0 0.0
    %v85 = vand.u32 %v35, 4294901760
    %v86 = vsub.f32 %v35, %v85
    %v87 = vand.u32 %v86, 4294901760
    %v88 = vsub.f32 %v86, %v87
    %v89 = vand.u32 %v88, 4294901760
    %90 = vmatpush.msra.mxu0 %v89
    %v91 = vand.u32 %v34, 4294901760
    %v92 = vsub.f32 %v34, %v91
    %v93 = vand.u32 %v92, 4294901760
    %v94 = vsub.f32 %v92, %v93
    %v95 = vand.u32 %v94, 4294901760
    %96 = vmatpush.msra.mxu0 %v95
    %v97 = vand.u32 %v33, 4294901760
    %v98 = vsub.f32 %v33, %v97
    %v99 = vand.u32 %v98, 4294901760
    %v100 = vsub.f32 %v98, %v99
    %v101 = vand.u32 %v100, 4294901760
    %102 = vmatpush.msra.mxu0 %v101
    %v103 = vand.u32 %v32, 4294901760
    %v104 = vsub.f32 %v32, %v103
    %v105 = vand.u32 %v104, 4294901760
    %v106 = vsub.f32 %v104, %v105
    %v107 = vand.u32 %v106, 4294901760
    %108 = vmatpush.msra.mxu0 %v107
    %v109 = vand.u32 %v42, 4294901760
    %110 = vmatmul.f32.gmra.mxu0 %v109
    %v111 = vpop.f32.mrf.mxu0
    %v112 = vadd.f32 %v71, %v111
    %113 = vdwg.mxu0
    %114 = vmatpush.msra.mxu0 0.0
    %115 = vmatpush.msra.mxu0 0.0
    %116 = vmatpush.msra.mxu0 0.0
    %117 = vmatpush.msra.mxu0 0.0
    %118 = vmatpush.msra.mxu0 0.0
    %119 = vmatpush.msra.mxu0 0.0
    %120 = vmatpush.msra.mxu0 0.0
    %121 = vmatpush.msra.mxu0 0.0
    %122 = vmatpush.msra.mxu0 0.0
    %123 = vmatpush.msra.mxu0 0.0
    %124 = vmatpush.msra.mxu0 0.0
    %125 = vmatpush.msra.mxu0 0.0
    %v126 = vand.u32 %v35, 4294901760
    %v127 = vsub.f32 %v35, %v126
    %128 = vmatpush.msra.mxu0 %v127
    %v129 = vand.u32 %v34, 4294901760
    %v130 = vsub.f32 %v34, %v129
    %131 = vmatpush.msra.mxu0 %v130
    %v132 = vand.u32 %v33, 4294901760
    %v133 = vsub.f32 %v33, %v132
    %134 = vmatpush.msra.mxu0 %v133
    %v135 = vand.u32 %v32, 4294901760
    %v136 = vsub.f32 %v32, %v135
    %137 = vmatpush.msra.mxu0 %v136
    %v138 = vand.u32 %v42, 4294901760
    %v139 = vsub.f32 %v42, %v138
    %140 = vmatmul.f32.gmra.mxu0 %v139
    %v141 = vpop.f32.mrf.mxu0
    %v142 = vadd.f32 %v112, %v141
    %143 = vdwg.mxu0
    %144 = vmatpush.msra.mxu0 0.0
    %145 = vmatpush.msra.mxu0 0.0
    %146 = vmatpush.msra.mxu0 0.0
    %147 = vmatpush.msra.mxu0 0.0
    %148 = vmatpush.msra.mxu0 0.0
    %149 = vmatpush.msra.mxu0 0.0
    %150 = vmatpush.msra.mxu0 0.0
    %151 = vmatpush.msra.mxu0 0.0
    %152 = vmatpush.msra.mxu0 0.0
    %153 = vmatpush.msra.mxu0 0.0
    %154 = vmatpush.msra.mxu0 0.0
    %155 = vmatpush.msra.mxu0 0.0
    %v156 = vand.u32 %v35, 4294901760
    %157 = vmatpush.msra.mxu0 %v156
    %v158 = vand.u32 %v34, 4294901760
    %159 = vmatpush.msra.mxu0 %v158
    %v160 = vand.u32 %v33, 4294901760
    %161 = vmatpush.msra.mxu0 %v160
    %v162 = vand.u32 %v32, 4294901760
    %163 = vmatpush.msra.mxu0 %v162
    %v164 = vand.u32 %v42, 4294901760
    %v165 = vsub.f32 %v42, %v164
    %v166 = vand.u32 %v165, 4294901760
    %167 = vmatmul.f32.gmra.mxu0 %v166
    %v168 = vpop.f32.mrf.mxu0
    %v169 = vadd.f32 %v142, %v168
    %170 = vdwg.mxu0
    %171 = vmatpush.msra.mxu0 0.0
    %172 = vmatpush.msra.mxu0 0.0
    %173 = vmatpush.msra.mxu0 0.0
    %174 = vmatpush.msra.mxu0 0.0
    %175 = vmatpush.msra.mxu0 0.0
    %176 = vmatpush.msra.mxu0 0.0
    %177 = vmatpush.msra.mxu0 0.0
    %178 = vmatpush.msra.mxu0 0.0
    %179 = vmatpush.msra.mxu0 0.0
    %180 = vmatpush.msra.mxu0 0.0
    %181 = vmatpush.msra.mxu0 0.0
    %182 = vmatpush.msra.mxu0 0.0
    %v183 = vand.u32 %v35, 4294901760
    %v184 = vsub.f32 %v35, %v183
    %v185 = vand.u32 %v184, 4294901760
    %186 = vmatpush.msra.mxu0 %v185
    %v187 = vand.u32 %v34, 4294901760
    %v188 = vsub.f32 %v34, %v187
    %v189 = vand.u32 %v188, 4294901760
    %190 = vmatpush.msra.mxu0 %v189
    %v191 = vand.u32 %v33, 4294901760
    %v192 = vsub.f32 %v33, %v191
    %v193 = vand.u32 %v192, 4294901760
    %194 = vmatpush.msra.mxu0 %v193
    %v195 = vand.u32 %v32, 4294901760
    %v196 = vsub.f32 %v32, %v195
    %v197 = vand.u32 %v196, 4294901760
    %198 = vmatpush.msra.mxu0 %v197
    %v199 = vand.u32 %v42, 4294901760
    %200 = vmatmul.f32.gmra.mxu0 %v199
    %v201 = vpop.f32.mrf.mxu0
    %v202 = vadd.f32 %v169, %v201
    %203 = vdwg.mxu0
    %204 = vmatpush.msra.mxu0 0.0
    %205 = vmatpush.msra.mxu0 0.0
    %206 = vmatpush.msra.mxu0 0.0
    %207 = vmatpush.msra.mxu0 0.0
    %208 = vmatpush.msra.mxu0 0.0
    %209 = vmatpush.msra.mxu0 0.0
    %210 = vmatpush.msra.mxu0 0.0
    %211 = vmatpush.msra.mxu0 0.0
    %212 = vmatpush.msra.mxu0 0.0
    %213 = vmatpush.msra.mxu0 0.0
    %214 = vmatpush.msra.mxu0 0.0
    %215 = vmatpush.msra.mxu0 0.0
    %v216 = vand.u32 %v35, 4294901760
    %217 = vmatpush.msra.mxu0 %v216
    %v218 = vand.u32 %v34, 4294901760
    %219 = vmatpush.msra.mxu0 %v218
    %v220 = vand.u32 %v33, 4294901760
    %221 = vmatpush.msra.mxu0 %v220
    %v222 = vand.u32 %v32, 4294901760
    %223 = vmatpush.msra.mxu0 %v222
    %v224 = vand.u32 %v42, 4294901760
    %225 = vmatmul.f32.gmra.mxu0 %v224
    %v226 = vpop.f32.mrf.mxu0
    %v227 = vadd.f32 %v202, %v226
    %228 = vdwg.mxu0
    %s229 = sld [smem:[#allocation2]]
    %v230 = vtanh.pop %v227
    %v231 = vmul.f32 %v230, 0.1
    %s232 = ssub.f32 0.0, %s229
    %v233 = vstv %s232
    %v234 = vmax.f32 %v233, %v231
    %v235 = vstv %s229
    %v236 = vmin.f32 %v235, %v234
    %v237 = vadd.f32 %v236, 1.0
    %v238 = vld [vmem:[%s1] sm:$0xf]
    %v239 = vld [vmem:[%s4] sm:$0x7]
    %vm240 = vcmask 23552
    %v242 = vsel %vm240, %v238, 0
    %vm244 = vcmask 1042432
    %v246 = vsel %vm244, %v239, 0
    %248 = vmatpush.msra.mxu0 0.0
    %249 = vmatpush.msra.mxu0 0.0
    %250 = vmatpush.msra.mxu0 0.0
    %251 = vmatpush.msra.mxu0 0.0
    %252 = vmatpush.msra.mxu0 0.0
    %253 = vmatpush.msra.mxu0 0.0
    %254 = vmatpush.msra.mxu0 0.0
    %255 = vmatpush.msra.mxu0 0.0
    %256 = vmatpush.msra.mxu0 0.0
    %257 = vmatpush.msra.mxu0 0.0
    %258 = vmatpush.msra.mxu0 0.0
    %259 = vmatpush.msra.mxu0 0.0
    %260 = vmatpush.msra.mxu0 0.0
    %261 = vmatpush.msra.mxu0 0.0
    %262 = vmatpush.msra.mxu0 0.0
    %v263 = vand.u32 %v246, 4294901760
    %264 = vmatpush.msra.mxu0 %v263
    %v265 = vand.u32 %v242, 4294901760
    %v266 = vsub.f32 %v242, %v265
    %v267 = vand.u32 %v266, 4294901760
    %v268 = vsub.f32 %v266, %v267
    %v269 = vand.u32 %v268, 4294901760
    %270 = vmatmul.f32.gmra.mxu0 %v269
    %v271 = vpop.f32.mrf.mxu0
    %v272 = vadd.f32 0.0, %v271
    %273 = vdwg.mxu0
    %274 = vmatpush.msra.mxu0 0.0
    %275 = vmatpush.msra.mxu0 0.0
    %276 = vmatpush.msra.mxu0 0.0
    %277 = vmatpush.msra.mxu0 0.0
    %278 = vmatpush.msra.mxu0 0.0
    %279 = vmatpush.msra.mxu0 0.0
    %280 = vmatpush.msra.mxu0 0.0
    %281 = vmatpush.msra.mxu0 0.0
    %282 = vmatpush.msra.mxu0 0.0
    %283 = vmatpush.msra.mxu0 0.0
    %284 = vmatpush.msra.mxu0 0.0
    %285 = vmatpush.msra.mxu0 0.0
    %286 = vmatpush.msra.mxu0 0.0
    %287 = vmatpush.msra.mxu0 0.0
    %288 = vmatpush.msra.mxu0 0.0
    %v289 = vand.u32 %v246, 4294901760
    %v290 = vsub.f32 %v246, %v289
    %v291 = vand.u32 %v290, 4294901760
    %v292 = vsub.f32 %v290, %v291
    %v293 = vand.u32 %v292, 4294901760
    %294 = vmatpush.msra.mxu0 %v293
    %v295 = vand.u32 %v242, 4294901760
    %296 = vmatmul.f32.gmra.mxu0 %v295
    %v297 = vpop.f32.mrf.mxu0
    %v298 = vadd.f32 %v272, %v297
    %299 = vdwg.mxu0
    %300 = vmatpush.msra.mxu0 0.0
    %301 = vmatpush.msra.mxu0 0.0
    %302 = vmatpush.msra.mxu0 0.0
    %303 = vmatpush.msra.mxu0 0.0
    %304 = vmatpush.msra.mxu0 0.0
    %305 = vmatpush.msra.mxu0 0.0
    %306 = vmatpush.msra.mxu0 0.0
    %307 = vmatpush.msra.mxu0 0.0
    %308 = vmatpush.msra.mxu0 0.0
    %309 = vmatpush.msra.mxu0 0.0
    %310 = vmatpush.msra.mxu0 0.0
    %311 = vmatpush.msra.mxu0 0.0
    %312 = vmatpush.msra.mxu0 0.0
    %313 = vmatpush.msra.mxu0 0.0
    %314 = vmatpush.msra.mxu0 0.0
    %v315 = vand.u32 %v246, 4294901760
    %v316 = vsub.f32 %v246, %v315
    %317 = vmatpush.msra.mxu0 %v316
    %v318 = vand.u32 %v242, 4294901760
    %v319 = vsub.f32 %v242, %v318
    %320 = vmatmul.f32.gmra.mxu0 %v319
    %v321 = vpop.f32.mrf.mxu0
    %v322 = vadd.f32 %v298, %v321
    %323 = vdwg.mxu0
    %324 = vmatpush.msra.mxu0 0.0
    %325 = vmatpush.msra.mxu0 0.0
    %326 = vmatpush.msra.mxu0 0.0
    %327 = vmatpush.msra.mxu0 0.0
    %328 = vmatpush.msra.mxu0 0.0
    %329 = vmatpush.msra.mxu0 0.0
    %330 = vmatpush.msra.mxu0 0.0
    %331 = vmatpush.msra.mxu0 0.0
    %332 = vmatpush.msra.mxu0 0.0
    %333 = vmatpush.msra.mxu0 0.0
    %334 = vmatpush.msra.mxu0 0.0
    %335 = vmatpush.msra.mxu0 0.0
    %336 = vmatpush.msra.mxu0 0.0
    %337 = vmatpush.msra.mxu0 0.0
    %338 = vmatpush.msra.mxu0 0.0
    %v339 = vand.u32 %v246, 4294901760
    %340 = vmatpush.msra.mxu0 %v339
    %v341 = vand.u32 %v242, 4294901760
    %v342 = vsub.f32 %v242, %v341
    %v343 = vand.u32 %v342, 4294901760
    %344 = vmatmul.f32.gmra.mxu0 %v343
    %v345 = vpop.f32.mrf.mxu0
    %v346 = vadd.f32 %v322, %v345
    %347 = vdwg.mxu0
    %348 = vmatpush.msra.mxu0 0.0
    %349 = vmatpush.msra.mxu0 0.0
    %350 = vmatpush.msra.mxu0 0.0
    %351 = vmatpush.msra.mxu0 0.0
    %352 = vmatpush.msra.mxu0 0.0
    %353 = vmatpush.msra.mxu0 0.0
    %354 = vmatpush.msra.mxu0 0.0
    %355 = vmatpush.msra.mxu0 0.0
    %356 = vmatpush.msra.mxu0 0.0
    %357 = vmatpush.msra.mxu0 0.0
    %358 = vmatpush.msra.mxu0 0.0
    %359 = vmatpush.msra.mxu0 0.0
    %360 = vmatpush.msra.mxu0 0.0
    %361 = vmatpush.msra.mxu0 0.0
    %362 = vmatpush.msra.mxu0 0.0
    %v363 = vand.u32 %v246, 4294901760
    %v364 = vsub.f32 %v246, %v363
    %v365 = vand.u32 %v364, 4294901760
    %366 = vmatpush.msra.mxu0 %v365
    %v367 = vand.u32 %v242, 4294901760
    %368 = vmatmul.f32.gmra.mxu0 %v367
    %v369 = vpop.f32.mrf.mxu0
    %v370 = vadd.f32 %v346, %v369
    %371 = vdwg.mxu0
    %372 = vmatpush.msra.mxu0 0.0
    %373 = vmatpush.msra.mxu0 0.0
    %374 = vmatpush.msra.mxu0 0.0
    %375 = vmatpush.msra.mxu0 0.0
    %376 = vmatpush.msra.mxu0 0.0
    %377 = vmatpush.msra.mxu0 0.0
    %378 = vmatpush.msra.mxu0 0.0
    %379 = vmatpush.msra.mxu0 0.0
    %380 = vmatpush.msra.mxu0 0.0
    %381 = vmatpush.msra.mxu0 0.0
    %382 = vmatpush.msra.mxu0 0.0
    %383 = vmatpush.msra.mxu0 0.0
    %384 = vmatpush.msra.mxu0 0.0
    %385 = vmatpush.msra.mxu0 0.0
    %386 = vmatpush.msra.mxu0 0.0
    %v387 = vand.u32 %v246, 4294901760
    %388 = vmatpush.msra.mxu0 %v387
    %v389 = vand.u32 %v242, 4294901760
    %390 = vmatmul.f32.gmra.mxu0 %v389
    %v391 = vpop.f32.mrf.mxu0
    %v392 = vadd.f32 %v370, %v391
    %393 = vdwg.mxu0
    %v394 = vld [vmem:[%s5] sm:$0x1f]
    %v395 = vld [vmem:[%s6] sm:$0x1]
    %v397 = vperm.slane %v395, 0
    %vm399 = vcmask 39936
    %v401 = vsel %vm399, %v237, 0
    %vm403 = vcmask 1044480
    %v405 = vsel %vm403, %v394, 0
    %407 = vmatpush.msra.mxu0 0.0
    %408 = vmatpush.msra.mxu0 0.0
    %409 = vmatpush.msra.mxu0 0.0
    %410 = vmatpush.msra.mxu0 0.0
    %411 = vmatpush.msra.mxu0 0.0
    %412 = vmatpush.msra.mxu0 0.0
    %413 = vmatpush.msra.mxu0 0.0
    %414 = vmatpush.msra.mxu0 0.0
    %415 = vmatpush.msra.mxu0 0.0
    %416 = vmatpush.msra.mxu0 0.0
    %417 = vmatpush.msra.mxu0 0.0
    %418 = vmatpush.msra.mxu0 0.0
    %419 = vmatpush.msra.mxu0 0.0
    %420 = vmatpush.msra.mxu0 0.0
    %421 = vmatpush.msra.mxu0 0.0
    %v422 = vand.u32 %v405, 4294901760
    %423 = vmatpush.msra.mxu0 %v422
    %v424 = vand.u32 %v401, 4294901760
    %v425 = vsub.f32 %v401, %v424
    %v426 = vand.u32 %v425, 4294901760
    %v427 = vsub.f32 %v425, %v426
    %v428 = vand.u32 %v427, 4294901760
    %429 = vmatmul.f32.gmra.mxu0 %v428
    %v430 = vpop.f32.mrf.mxu0
    %v431 = vadd.f32 %v397, %v430
    %432 = vdwg.mxu0
    %433 = vmatpush.msra.mxu0 0.0
    %434 = vmatpush.msra.mxu0 0.0
    %435 = vmatpush.msra.mxu0 0.0
    %436 = vmatpush.msra.mxu0 0.0
    %437 = vmatpush.msra.mxu0 0.0
    %438 = vmatpush.msra.mxu0 0.0
    %439 = vmatpush.msra.mxu0 0.0
    %440 = vmatpush.msra.mxu0 0.0
    %441 = vmatpush.msra.mxu0 0.0
    %442 = vmatpush.msra.mxu0 0.0
    %443 = vmatpush.msra.mxu0 0.0
    %444 = vmatpush.msra.mxu0 0.0
    %445 = vmatpush.msra.mxu0 0.0
    %446 = vmatpush.msra.mxu0 0.0
    %447 = vmatpush.msra.mxu0 0.0
    %v448 = vand.u32 %v405, 4294901760
    %v449 = vsub.f32 %v405, %v448
    %v450 = vand.u32 %v449, 4294901760
    %v451 = vsub.f32 %v449, %v450
    %v452 = vand.u32 %v451, 4294901760
    %453 = vmatpush.msra.mxu0 %v452
    %v454 = vand.u32 %v401, 4294901760
    %455 = vmatmul.f32.gmra.mxu0 %v454
    %v456 = vpop.f32.mrf.mxu0
    %v457 = vadd.f32 %v431, %v456
    %458 = vdwg.mxu0
    %459 = vmatpush.msra.mxu0 0.0
    %460 = vmatpush.msra.mxu0 0.0
    %461 = vmatpush.msra.mxu0 0.0
    %462 = vmatpush.msra.mxu0 0.0
    %463 = vmatpush.msra.mxu0 0.0
    %464 = vmatpush.msra.mxu0 0.0
    %465 = vmatpush.msra.mxu0 0.0
    %466 = vmatpush.msra.mxu0 0.0
    %467 = vmatpush.msra.mxu0 0.0
    %468 = vmatpush.msra.mxu0 0.0
    %469 = vmatpush.msra.mxu0 0.0
    %470 = vmatpush.msra.mxu0 0.0
    %471 = vmatpush.msra.mxu0 0.0
    %472 = vmatpush.msra.mxu0 0.0
    %473 = vmatpush.msra.mxu0 0.0
    %v474 = vand.u32 %v405, 4294901760
    %v475 = vsub.f32 %v405, %v474
    %476 = vmatpush.msra.mxu0 %v475
    %v477 = vand.u32 %v401, 4294901760
    %v478 = vsub.f32 %v401, %v477
    %479 = vmatmul.f32.gmra.mxu0 %v478
    %v480 = vpop.f32.mrf.mxu0
    %v481 = vadd.f32 %v457, %v480
    %482 = vdwg.mxu0
    %483 = vmatpush.msra.mxu0 0.0
    %484 = vmatpush.msra.mxu0 0.0
    %485 = vmatpush.msra.mxu0 0.0
    %486 = vmatpush.msra.mxu0 0.0
    %487 = vmatpush.msra.mxu0 0.0
    %488 = vmatpush.msra.mxu0 0.0
    %489 = vmatpush.msra.mxu0 0.0
    %490 = vmatpush.msra.mxu0 0.0
    %491 = vmatpush.msra.mxu0 0.0
    %492 = vmatpush.msra.mxu0 0.0
    %493 = vmatpush.msra.mxu0 0.0
    %494 = vmatpush.msra.mxu0 0.0
    %495 = vmatpush.msra.mxu0 0.0
    %496 = vmatpush.msra.mxu0 0.0
    %497 = vmatpush.msra.mxu0 0.0
    %v498 = vand.u32 %v405, 4294901760
    %499 = vmatpush.msra.mxu0 %v498
    %v500 = vand.u32 %v401, 4294901760
    %v501 = vsub.f32 %v401, %v500
    %v502 = vand.u32 %v501, 4294901760
    %503 = vmatmul.f32.gmra.mxu0 %v502
    %v504 = vpop.f32.mrf.mxu0
    %v505 = vadd.f32 %v481, %v504
    %506 = vdwg.mxu0
    %507 = vmatpush.msra.mxu0 0.0
    %508 = vmatpush.msra.mxu0 0.0
    %509 = vmatpush.msra.mxu0 0.0
    %510 = vmatpush.msra.mxu0 0.0
    %511 = vmatpush.msra.mxu0 0.0
    %512 = vmatpush.msra.mxu0 0.0
    %513 = vmatpush.msra.mxu0 0.0
    %514 = vmatpush.msra.mxu0 0.0
    %515 = vmatpush.msra.mxu0 0.0
    %516 = vmatpush.msra.mxu0 0.0
    %517 = vmatpush.msra.mxu0 0.0
    %518 = vmatpush.msra.mxu0 0.0
    %519 = vmatpush.msra.mxu0 0.0
    %520 = vmatpush.msra.mxu0 0.0
    %521 = vmatpush.msra.mxu0 0.0
    %v522 = vand.u32 %v405, 4294901760
    %v523 = vsub.f32 %v405, %v522
    %v524 = vand.u32 %v523, 4294901760
    %525 = vmatpush.msra.mxu0 %v524
    %v526 = vand.u32 %v401, 4294901760
    %527 = vmatmul.f32.gmra.mxu0 %v526
    %v528 = vpop.f32.mrf.mxu0
    %v529 = vadd.f32 %v505, %v528
    %530 = vdwg.mxu0
    %531 = vmatpush.msra.mxu0 0.0
    %532 = vmatpush.msra.mxu0 0.0
    %533 = vmatpush.msra.mxu0 0.0
    %534 = vmatpush.msra.mxu0 0.0
    %535 = vmatpush.msra.mxu0 0.0
    %536 = vmatpush.msra.mxu0 0.0
    %537 = vmatpush.msra.mxu0 0.0
    %538 = vmatpush.msra.mxu0 0.0
    %539 = vmatpush.msra.mxu0 0.0
    %540 = vmatpush.msra.mxu0 0.0
    %541 = vmatpush.msra.mxu0 0.0
    %542 = vmatpush.msra.mxu0 0.0
    %543 = vmatpush.msra.mxu0 0.0
    %544 = vmatpush.msra.mxu0 0.0
    %545 = vmatpush.msra.mxu0 0.0
    %v546 = vand.u32 %v405, 4294901760
    %547 = vmatpush.msra.mxu0 %v546
    %v548 = vand.u32 %v401, 4294901760
    %549 = vmatmul.f32.gmra.mxu0 %v548
    %v550 = vpop.f32.mrf.mxu0
    %v551 = vadd.f32 %v529, %v550
    %552 = vdwg.mxu0
    %v553 = vmul.f32 %v392, %v551
    %vm554 = vcmask 60416
    %555 = vst.msk [vmem:[#allocation3] sm:$0xf] %vm554, %v553
    // Predicated region
    $region34: #{dynsyn_forward.1} parent=1 // pred_check
      _
    $region35: #{dynsyn_forward.1} parent=1 // pred_check_branch
      %557 = sbr.rel (0) target = $region37
    $region36: #{dynsyn_forward.1} parent=1 // pred_region
      %559 = vsyncadd [#allocation4], 0
      %s561 = sshll.u32 [#allocation3], 4
      %s562 = int_to_ptr.vmem [resolvable:$true] %s561
      %s563 = sshll.u32 %s8, 4
      %s564 = int_to_ptr.hbm [resolvable:$true] %s563
      %566 = dma.vmem_to_hbm [thread:$0]  %s562, 64, %s564, [#allocation4]
    $region37: #{dynsyn_forward.1} parent=1 // pred_fallthru
      _
    // Predicated region
    $region38: #{dynsyn_forward.1} parent=1 // pred_check
      _
    $region39: #{dynsyn_forward.1} parent=1 // pred_check_branch
      %568 = sbr.rel (0) target = $region41
    $region40: #{dynsyn_forward.1} parent=1 // pred_region
      %570 = dma.done [#allocation4], 64
    $region41: #{dynsyn_forward.1} parent=1 // pred_fallthru
      _
    %571 = vsyncpa [#allocation4], 1

</llo_original>
